<compile_context>
chip_gen: v7x
topology: tpu7x:2x2x1
jax: 0.10.0
libtpu: 0.0.40
codegen_flags: <defaults>
</compile_context>

<pallas_src>
import functools

import jax
import jax.numpy as jnp
from jax.experimental import pallas as pl
from jax.experimental.pallas import tpu as pltpu


def actor_kernel(x_ref, w1_ref, b1_ref, w2_ref, b2_ref, o_ref):
    # x_ref: (tb, S) compute dtype; w1_ref: (S, Mp); b1_ref: (1, Mp) f32
    # w2_ref: (Mp, A); b2_ref: (1, A) f32; o_ref: (tb, A) f32
    h = jnp.dot(x_ref[...], w1_ref[...], preferred_element_type=jnp.float32)  # MXU
    h = jnp.maximum(h + b1_ref[...], 0.0)                                     # VPU, f32
    h = h.astype(w2_ref.dtype)
    out = jnp.dot(h, w2_ref[...], preferred_element_type=jnp.float32)         # MXU
    o_ref[...] = (out + b2_ref[...]).astype(o_ref.dtype)


def _round_up(x, m):
    return (x + m - 1) // m * m


def pad_actor_params(w1, b1, w2, b2, compute_dtype=jnp.float32):
    """Pad/cast parameters ONCE (at creation/update time), not per forward call.

    w1: (S, M); b1: (M,)|(1,M); w2: (M, A); b2: (A,)|(1,A).
    Hidden dim M is zero-padded to a lane multiple (128); padded hidden columns
    produce relu(0+0)=0 and the corresponding zero rows of w2 contribute 0, so
    the forward math is identical to the unpadded module.
    """
    S, M = w1.shape
    M_w, A = w2.shape
    assert M == M_w
    Mp = _round_up(M, 128)
    w1p = jnp.zeros((S, Mp), compute_dtype).at[:, :M].set(w1.astype(compute_dtype))
    b1p = jnp.zeros((1, Mp), jnp.float32).at[:, :M].set(
        jnp.reshape(b1, (1, M)).astype(jnp.float32))
    w2p = jnp.zeros((Mp, A), compute_dtype).at[:M, :].set(w2.astype(compute_dtype))
    b2p = jnp.reshape(b2, (1, A)).astype(jnp.float32)
    return w1p, b1p, w2p, b2p


@functools.partial(jax.jit, static_argnames=("block_b",))
def actor_forward(state, w1p, b1p, w2p, b2p, *, block_b=2048):
    """state: (B, S) float; pre-padded params from pad_actor_params(). Returns (B, A) f32."""
    B, S = state.shape
    S_w, Mp = w1p.shape
    Mp2, A = w2p.shape
    assert S == S_w and Mp == Mp2

    compute_dtype = jnp.dtype(w1p.dtype)
    sub = 16 if compute_dtype == jnp.dtype(jnp.bfloat16) else 8

    # Batch tile: aim for exactly ~2 grid steps (keeps both v7x TCs busy via
    # the "parallel" axis; on v5e/v6e the extra step costs ~0.35us), capped at
    # block_b rows per tile.  Ragged last block is handled by the pipeline.
    tb = min(_round_up(block_b, sub), max(sub, _round_up(pl.cdiv(B, 2), sub)))
    grid = (pl.cdiv(B, tb),)

    x = state.astype(compute_dtype)

    itemsize = compute_dtype.itemsize
    flops = 2 * B * (S * Mp + Mp * A)
    bytes_accessed = (B * S * itemsize                       # state
                      + (S * Mp + Mp * A) * itemsize         # weights
                      + (Mp + A) * 4                         # biases (f32)
                      + B * A * 4)                           # output (f32)

    out = pl.pallas_call(
        actor_kernel,
        out_shape=jax.ShapeDtypeStruct((B, A), jnp.float32),
        grid_spec=pltpu.PrefetchScalarGridSpec(
            num_scalar_prefetch=0,
            grid=grid,
            in_specs=[
                pl.BlockSpec((tb, S), lambda i: (i, 0)),    # state tile (pipelined, ragged-safe)
                pl.BlockSpec((S, Mp), lambda i: (0, 0)),    # weights stay VMEM-resident
                pl.BlockSpec((1, Mp), lambda i: (0, 0)),
                pl.BlockSpec((Mp, A), lambda i: (0, 0)),
                pl.BlockSpec((1, A), lambda i: (0, 0)),
            ],
            out_specs=pl.BlockSpec((tb, A), lambda i: (i, 0)),  # narrow (B, A) writeback
        ),
        compiler_params=pltpu.CompilerParams(
            dimension_semantics=("parallel",),          # megacore-shard the batch axis
            vmem_limit_bytes=32 * 1024 * 1024,          # safe on v5e/v6e/v7x
        ),
        cost_estimate=pl.CostEstimate(
            flops=flops, transcendentals=0, bytes_accessed=bytes_accessed),
    )(x, w1p, b1p, w2p, b2p)
    return out


def make_params(key, state_space_size, action_space_size, mid_dim=60):
    # Mirrors Actor._reset_parameters: every parameter ~ Normal(0.0, 0.1).
    k1, k2, k3, k4 = jax.random.split(key, 4)
    w1 = 0.1 * jax.random.normal(k1, (state_space_size, mid_dim), jnp.float32)
    b1 = 0.1 * jax.random.normal(k2, (1, mid_dim), jnp.float32)
    w2 = 0.1 * jax.random.normal(k3, (mid_dim, action_space_size), jnp.float32)
    b2 = 0.1 * jax.random.normal(k4, (1, action_space_size), jnp.float32)
    return w1, b1, w2, b2


def _reference(state, w1, b1, w2, b2):
    return jnp.maximum(state @ w1 + b1, 0.0) @ w2 + b2


if __name__ == "__main__":
    key = jax.random.PRNGKey(0)
    state_space_size, action_space_size, mid_dim = 16, 4, 60

    k_state, k_params, k_big = jax.random.split(key, 3)
    w1, b1, w2, b2 = make_params(k_params, state_space_size,
                                 action_space_size, mid_dim)

    # Params padded ONCE (hot path only casts the state + launches the kernel).
    p_f32 = pad_actor_params(w1, b1, w2, b2, compute_dtype=jnp.float32)
    p_bf16 = pad_actor_params(w1, b1, w2, b2, compute_dtype=jnp.bfloat16)

    # 1) Small batch (module-typical shape), f32 path, single grid step.
    batch = 8
    state = jax.random.normal(k_state, (batch, state_space_size), jnp.float32)
    logits = actor_forward(state, *p_f32)
    jax.block_until_ready(logits)
    ref = _reference(state, w1, b1, w2, b2)
    assert logits.shape == (batch, action_space_size)
    assert jnp.allclose(logits, ref, atol=1e-5, rtol=1e-5)

    # 2) Batch that does NOT divide the tile: ragged 2-step "parallel" grid, f32.
    batch2 = 100
    state2 = jax.random.normal(k_big, (batch2, state_space_size), jnp.float32)
    logits2 = actor_forward(state2, *p_f32)
    jax.block_until_ready(logits2)
    ref2 = _reference(state2, w1, b1, w2, b2)
    assert logits2.shape == (batch2, action_space_size)
    assert jnp.allclose(logits2, ref2, atol=1e-5, rtol=1e-5)

    # 3) bf16-operand path (f32 accumulation / bias / ReLU), ragged grid,
    #    looser tolerance (both matmuls use bf16 operands).
    batch3 = 300
    state3 = jax.random.normal(k_big, (batch3, state_space_size), jnp.float32)
    logits3 = actor_forward(state3, *p_bf16)
    jax.block_until_ready(logits3)
    ref3 = _reference(state3, w1, b1, w2, b2)
    assert logits3.shape == (batch3, action_space_size)
    assert jnp.allclose(logits3, ref3, atol=3e-2, rtol=3e-2)

    print("KERNEL_OK")
</pallas_src>

<mosaic_0001>
module attributes {stable_mosaic.version = 11 : i64} {
  func.func @actor_kernel(%arg0: i32, %arg1: memref<8x16xf32, #tpu.memory_space<vmem>>, %arg2: memref<16x128xf32, #tpu.memory_space<vmem>>, %arg3: memref<1x128xf32, #tpu.memory_space<vmem>>, %arg4: memref<128x4xf32, #tpu.memory_space<vmem>>, %arg5: memref<1x4xf32, #tpu.memory_space<vmem>>, %arg6: memref<8x4xf32, #tpu.memory_space<vmem>>) attributes {dimension_semantics = [#tpu.dimension_semantics<parallel>], iteration_bounds = array<i64: 1>, scalar_prefetch = 0 : i64, scratch_operands = 0 : i64, tpu.core_type = #tpu.core_type<tc>, window_params = [{transform_indices = @transform_0, window_bounds = array<i64: 8, 16>}, {pipeline_mode = #tpu.pipeline_mode<synchronous>, transform_indices = @transform_1, window_bounds = array<i64: 16, 128>}, {pipeline_mode = #tpu.pipeline_mode<synchronous>, transform_indices = @transform_2, window_bounds = array<i64: 1, 128>}, {pipeline_mode = #tpu.pipeline_mode<synchronous>, transform_indices = @transform_3, window_bounds = array<i64: 128, 4>}, {pipeline_mode = #tpu.pipeline_mode<synchronous>, transform_indices = @transform_4, window_bounds = array<i64: 1, 4>}, {transform_indices = @transform_5, window_bounds = array<i64: 8, 4>}]} {
    %c0 = arith.constant 0 : index
    %c0_0 = arith.constant 0 : index
    %0 = vector.load %arg1[%c0, %c0_0] : memref<8x16xf32, #tpu.memory_space<vmem>>, vector<8x16xf32>
    %c0_1 = arith.constant 0 : index
    %c0_2 = arith.constant 0 : index
    %1 = vector.load %arg2[%c0_1, %c0_2] : memref<16x128xf32, #tpu.memory_space<vmem>>, vector<16x128xf32>
    %cst = arith.constant dense<0.000000e+00> : vector<8x128xf32>
    %2 = tpu.matmul %0, %1, %cst {dimension_numbers = #tpu.dot_dimension_numbers<[1], [0], [0], [1], [0, 0, 1, 1], [], []>} : vector<8x16xf32>, vector<16x128xf32>, vector<8x128xf32> -> vector<8x128xf32>
    %c0_3 = arith.constant 0 : index
    %c0_4 = arith.constant 0 : index
    %3 = vector.load %arg3[%c0_3, %c0_4] : memref<1x128xf32, #tpu.memory_space<vmem>>, vector<1x128xf32>
    %4 = vector.broadcast %3 : vector<1x128xf32> to vector<8x128xf32>
    %5 = arith.addf %2, %4 : vector<8x128xf32>
    %cst_5 = arith.constant 0.000000e+00 : f32
    %6 = vector.broadcast %cst_5 : f32 to vector<8x128xf32>
    %7 = arith.maximumf %5, %6 : vector<8x128xf32>
    %c0_6 = arith.constant 0 : index
    %c0_7 = arith.constant 0 : index
    %8 = vector.load %arg4[%c0_6, %c0_7] : memref<128x4xf32, #tpu.memory_space<vmem>>, vector<128x4xf32>
    %cst_8 = arith.constant dense<0.000000e+00> : vector<8x4xf32>
    %9 = tpu.matmul %7, %8, %cst_8 {dimension_numbers = #tpu.dot_dimension_numbers<[1], [0], [0], [1], [0, 0, 1, 1], [], []>} : vector<8x128xf32>, vector<128x4xf32>, vector<8x4xf32> -> vector<8x4xf32>
    %c0_9 = arith.constant 0 : index
    %c0_10 = arith.constant 0 : index
    %10 = vector.load %arg5[%c0_9, %c0_10] : memref<1x4xf32, #tpu.memory_space<vmem>>, vector<1x4xf32>
    %11 = vector.broadcast %10 : vector<1x4xf32> to vector<8x4xf32>
    %12 = arith.addf %9, %11 : vector<8x4xf32>
    %c0_11 = arith.constant 0 : index
    %c0_12 = arith.constant 0 : index
    %13 = vector.load %arg6[%c0_11, %c0_12] : memref<8x4xf32, #tpu.memory_space<vmem>>, vector<8x4xf32>
    tpu.vector_store %arg6[%c0_11, %c0_12], %12 {strides = array<i32>} : memref<8x4xf32, #tpu.memory_space<vmem>>, vector<8x4xf32>,
    return
  }
  func.func @transform_0(%arg0: i32) -> (i32, i32) {
    %c0_i32 = arith.constant 0 : i32
    %c0_i32_0 = arith.constant 0 : i32
    return %arg0, %c0_i32 : i32, i32
  }
  func.func @transform_1(%arg0: i32) -> (i32, i32) {
    %c0_i32 = arith.constant 0 : i32
    %c0_i32_0 = arith.constant 0 : i32
    %c0_i32_1 = arith.constant 0 : i32
    return %c0_i32, %c0_i32_0 : i32, i32
  }
  func.func @transform_2(%arg0: i32) -> (i32, i32) {
    %c0_i32 = arith.constant 0 : i32
    %c0_i32_0 = arith.constant 0 : i32
    %c0_i32_1 = arith.constant 0 : i32
    return %c0_i32, %c0_i32_0 : i32, i32
  }
  func.func @transform_3(%arg0: i32) -> (i32, i32) {
    %c0_i32 = arith.constant 0 : i32
    %c0_i32_0 = arith.constant 0 : i32
    %c0_i32_1 = arith.constant 0 : i32
    return %c0_i32, %c0_i32_0 : i32, i32
  }
  func.func @transform_4(%arg0: i32) -> (i32, i32) {
    %c0_i32 = arith.constant 0 : i32
    %c0_i32_0 = arith.constant 0 : i32
    %c0_i32_1 = arith.constant 0 : i32
    return %c0_i32, %c0_i32_0 : i32, i32
  }
  func.func @transform_5(%arg0: i32) -> (i32, i32) {
    %c0_i32 = arith.constant 0 : i32
    %c0_i32_0 = arith.constant 0 : i32
    return %arg0, %c0_i32 : i32, i32
  }
}

</mosaic_0001>

<llo_original>
// kernel: actor_forward.1
$region0: #{actor_forward.1}
  #allocation0 [shape = 'u32[]', space=smem, size = 0x4, offset = 0x4, fixed_abs, tag = 'smem constant byte address 0x4 - core index']
  #allocation1 [shape = 'u32[144,128]{1,0:T(1,128)}', space=vmem, size = 0x12000, scoped, tag = 'internal scratch']
  %s0 = inlined_call_operand.vmem [shape: f32[8,16], index: 0, kind: input, shape index: {}]
  %s1 = inlined_call_operand.vmem [shape: f32[16,128], index: 1, kind: input, shape index: {}]
  %s2 = inlined_call_operand.vmem [shape: f32[1,128], index: 2, kind: input, shape index: {}]
  %s3 = inlined_call_operand.vmem [shape: f32[128,4], index: 3, kind: input, shape index: {}]
  %s4 = inlined_call_operand.vmem [shape: f32[1,4], index: 4, kind: input, shape index: {}]
  %s5 = inlined_call_operand.vmem [shape: f32[8,4], index: 5, kind: output, shape index: {}]
  %s6 = sld [smem:[#allocation0]]
  $region30: #{actor_forward.1} parent=0
    _
  %s8 = ssub.s32 1, %s6
  %s9 = scalar_select 0, %s8, %s6
  // Predicated region
  $region2: #{actor_forward.1} parent=0 // pred_check
    _
  $region3: #{actor_forward.1} parent=0 // pred_check_branch
    %11 = sbr.rel (0) target = $region5
  $region4: #{actor_forward.1} parent=0 // pred_region
    _
  $region5: #{actor_forward.1} parent=0 // pred_fallthru
    _
  // Predicated region
  $region6: #{actor_forward.1} parent=0 // pred_check
    _
  $region7: #{actor_forward.1} parent=0 // pred_check_branch
    %13 = sbr.rel (0) target = $region9
  $region8: #{actor_forward.1} parent=0 // pred_region
    _
  $region9: #{actor_forward.1} parent=0 // pred_fallthru
    _
  // Predicated region
  $region10: #{actor_forward.1} parent=0 // pred_check
    _
  $region11: #{actor_forward.1} parent=0 // pred_check_branch
    %15 = sbr.rel (0) target = $region13
  $region12: #{actor_forward.1} parent=0 // pred_region
    _
  $region13: #{actor_forward.1} parent=0 // pred_fallthru
    _
  // Predicated region
  $region14: #{actor_forward.1} parent=0 // pred_check
    _
  $region15: #{actor_forward.1} parent=0 // pred_check_branch
    %17 = sbr.rel (0) target = $region17
  $region16: #{actor_forward.1} parent=0 // pred_region
    _
  $region17: #{actor_forward.1} parent=0 // pred_fallthru
    _
  // Predicated region
  $region18: #{actor_forward.1} parent=0 // pred_check
    _
  $region19: #{actor_forward.1} parent=0 // pred_check_branch
    %19 = sbr.rel (0) target = $region21
  $region20: #{actor_forward.1} parent=0 // pred_region
    _
  $region21: #{actor_forward.1} parent=0 // pred_fallthru
    _
  %v20 = vld [vmem:[%s0] sm:$0xff]
  %v21 = vld [vmem:[%s1] sm:$0xff]
  %v22 = vld [vmem:[%s1 + $0x8] sm:$0xff]
  %v23 = vld [vmem:[%s2] sm:$0x1]
  %v25 = vlaneseq
  %v26 = vshrl.u32 %v25, 7
  %v27 = vsub.s32 0, %v26
  %v28 = vrot.slane %v23, %v27
  %vm30 = vcmask 130048
  %v32 = vsel %vm30, %v20, 0
  %34 = vmatprep.subr.mxu0 0.0
  %35 = vmatpush1.msra.mxu0 %v21
  %36 = vmatprep.subr.mxu0 0.0
  %37 = vmatpush1.msra.mxu0 %v22
  %38 = vmatprep.subr.mxu0 0.0
  %39 = vmatpush1.msra.mxu0 0.0
  %40 = vmatprep.subr.mxu0 0.0
  %41 = vmatpush1.msra.mxu0 0.0
  %42 = vmatprep.subr.mxu0 0.0
  %43 = vmatpush1.msra.mxu0 0.0
  %44 = vmatprep.subr.mxu0 0.0
  %45 = vmatpush1.msra.mxu0 0.0
  %46 = vmatprep.subr.mxu0 0.0
  %47 = vmatpush1.msra.mxu0 0.0
  %48 = vmatprep.subr.mxu0 0.0
  %49 = vmatpush1.msra.mxu0 0.0
  %50 = vmatprep.subr.mxu0 0.0
  %51 = vmatpush1.msra.mxu0 0.0
  %52 = vmatprep.subr.mxu0 0.0
  %53 = vmatpush1.msra.mxu0 0.0
  %54 = vmatprep.subr.mxu0 0.0
  %55 = vmatpush1.msra.mxu0 0.0
  %56 = vmatprep.subr.mxu0 0.0
  %57 = vmatpush1.msra.mxu0 0.0
  %58 = vmatprep.subr.mxu0 0.0
  %59 = vmatpush1.msra.mxu0 0.0
  %60 = vmatprep.subr.mxu0 0.0
  %61 = vmatpush1.msra.mxu0 0.0
  %62 = vmatprep.subr.mxu0 0.0
  %63 = vmatpush1.msra.mxu0 0.0
  %64 = vmatprep.subr.mxu0 0.0
  %65 = vmatpush1.msra.mxu0 0.0
  %66 = vmatprep.subr.mxu0 0.0
  %67 = vmatpush1.msra.mxu0 0.0
  %68 = vmatprep.subr.mxu0 0.0
  %69 = vmatpush1.msra.mxu0 0.0
  %70 = vmatprep.subr.mxu0 0.0
  %71 = vmatpush1.msra.mxu0 0.0
  %72 = vmatprep.subr.mxu0 0.0
  %73 = vmatpush1.msra.mxu0 0.0
  %74 = vmatprep.subr.mxu0 0.0
  %75 = vmatpush1.msra.mxu0 0.0
  %76 = vmatprep.subr.mxu0 0.0
  %77 = vmatpush1.msra.mxu0 0.0
  %78 = vmatprep.subr.mxu0 0.0
  %79 = vmatpush1.msra.mxu0 0.0
  %80 = vmatprep.subr.mxu0 0.0
  %81 = vmatpush1.msra.mxu0 0.0
  %82 = vmatprep.subr.mxu0 0.0
  %83 = vmatpush1.msra.mxu0 0.0
  %84 = vmatprep.subr.mxu0 0.0
  %85 = vmatpush1.msra.mxu0 0.0
  %86 = vmatprep.subr.mxu0 0.0
  %87 = vmatpush1.msra.mxu0 0.0
  %88 = vmatprep.subr.mxu0 0.0
  %89 = vmatpush1.msra.mxu0 0.0
  %90 = vmatprep.subr.mxu0 0.0
  %91 = vmatpush1.msra.mxu0 0.0
  %92 = vmatprep.subr.mxu0 0.0
  %93 = vmatpush1.msra.mxu0 0.0
  %94 = vmatprep.subr.mxu0 0.0
  %95 = vmatpush1.msra.mxu0 0.0
  %96 = vmatprep.subr.mxu0 0.0
  %97 = vmatpush1.msra.mxu0 0.0
  %98 = vmatprep.mubr.f32.mxu0 0.0
  %99 = vmatmul.mubr.f32.gmra.mrb[0].mxu0 %v32
  %v100 = vpop.f32.mrb[0].mxu0
  %v101 = vadd.f32 %v28, %v100
  %v102 = vpop.f32.mrb[0].mxu0
  %103 = vdwg.mxu0
  %v104 = vmax.f32 %v101, 0.0
  %v105 = vld [vmem:[%s3] sm:$0xff]
  %v106 = vld [vmem:[%s3 + $0x8] sm:$0xff]
  %v107 = vld [vmem:[%s3 + $0x10] sm:$0xff]
  %v108 = vld [vmem:[%s3 + $0x18] sm:$0xff]
  %v109 = vld [vmem:[%s3 + $0x20] sm:$0xff]
  %v110 = vld [vmem:[%s3 + $0x28] sm:$0xff]
  %v111 = vld [vmem:[%s3 + $0x30] sm:$0xff]
  %v112 = vld [vmem:[%s3 + $0x38] sm:$0xff]
  %v113 = vld [vmem:[%s3 + $0x40] sm:$0xff]
  %v114 = vld [vmem:[%s3 + $0x48] sm:$0xff]
  %v115 = vld [vmem:[%s3 + $0x50] sm:$0xff]
  %v116 = vld [vmem:[%s3 + $0x58] sm:$0xff]
  %v117 = vld [vmem:[%s3 + $0x60] sm:$0xff]
  %v118 = vld [vmem:[%s3 + $0x68] sm:$0xff]
  %v119 = vld [vmem:[%s3 + $0x70] sm:$0xff]
  %v120 = vld [vmem:[%s3 + $0x78] sm:$0xff]
  %v121 = vld [vmem:[%s4] sm:$0x1]
  %v123 = vlaneseq
  %v124 = vshrl.u32 %v123, 7
  %v125 = vsub.s32 0, %v124
  %v126 = vrot.slane %v121, %v125
  %128 = vmatprep.subr.mxu0 0.0
  %129 = vmatpush1.msra.mxu0 %v105
  %130 = vmatprep.subr.mxu0 0.0
  %131 = vmatpush1.msra.mxu0 %v106
  %132 = vmatprep.subr.mxu0 0.0
  %133 = vmatpush1.msra.mxu0 %v107
  %134 = vmatprep.subr.mxu0 0.0
  %135 = vmatpush1.msra.mxu0 %v108
  %136 = vmatprep.subr.mxu0 0.0
  %137 = vmatpush1.msra.mxu0 %v109
  %138 = vmatprep.subr.mxu0 0.0
  %139 = vmatpush1.msra.mxu0 %v110
  %140 = vmatprep.subr.mxu0 0.0
  %141 = vmatpush1.msra.mxu0 %v111
  %142 = vmatprep.subr.mxu0 0.0
  %143 = vmatpush1.msra.mxu0 %v112
  %144 = vmatprep.subr.mxu0 0.0
  %145 = vmatpush1.msra.mxu0 %v113
  %146 = vmatprep.subr.mxu0 0.0
  %147 = vmatpush1.msra.mxu0 %v114
  %148 = vmatprep.subr.mxu0 0.0
  %149 = vmatpush1.msra.mxu0 %v115
  %150 = vmatprep.subr.mxu0 0.0
  %151 = vmatpush1.msra.mxu0 %v116
  %152 = vmatprep.subr.mxu0 0.0
  %153 = vmatpush1.msra.mxu0 %v117
  %154 = vmatprep.subr.mxu0 0.0
  %155 = vmatpush1.msra.mxu0 %v118
  %156 = vmatprep.subr.mxu0 0.0
  %157 = vmatpush1.msra.mxu0 %v119
  %158 = vmatprep.subr.mxu0 0.0
  %159 = vmatpush1.msra.mxu0 %v120
  %160 = vmatprep.subr.mxu0 0.0
  %161 = vmatpush1.msra.mxu0 0.0
  %162 = vmatprep.subr.mxu0 0.0
  %163 = vmatpush1.msra.mxu0 0.0
  %164 = vmatprep.subr.mxu0 0.0
  %165 = vmatpush1.msra.mxu0 0.0
  %166 = vmatprep.subr.mxu0 0.0
  %167 = vmatpush1.msra.mxu0 0.0
  %168 = vmatprep.subr.mxu0 0.0
  %169 = vmatpush1.msra.mxu0 0.0
  %170 = vmatprep.subr.mxu0 0.0
  %171 = vmatpush1.msra.mxu0 0.0
  %172 = vmatprep.subr.mxu0 0.0
  %173 = vmatpush1.msra.mxu0 0.0
  %174 = vmatprep.subr.mxu0 0.0
  %175 = vmatpush1.msra.mxu0 0.0
  %176 = vmatprep.subr.mxu0 0.0
  %177 = vmatpush1.msra.mxu0 0.0
  %178 = vmatprep.subr.mxu0 0.0
  %179 = vmatpush1.msra.mxu0 0.0
  %180 = vmatprep.subr.mxu0 0.0
  %181 = vmatpush1.msra.mxu0 0.0
  %182 = vmatprep.subr.mxu0 0.0
  %183 = vmatpush1.msra.mxu0 0.0
  %184 = vmatprep.subr.mxu0 0.0
  %185 = vmatpush1.msra.mxu0 0.0
  %186 = vmatprep.subr.mxu0 0.0
  %187 = vmatpush1.msra.mxu0 0.0
  %188 = vmatprep.subr.mxu0 0.0
  %189 = vmatpush1.msra.mxu0 0.0
  %190 = vmatprep.subr.mxu0 0.0
  %191 = vmatpush1.msra.mxu0 0.0
  %192 = vmatprep.mubr.f32.mxu0 0.0
  %193 = vmatmul.mubr.f32.gmra.mrb[0].mxu0 %v104
  %v194 = vpop.f32.mrb[0].mxu0
  %v195 = vadd.f32 %v126, %v194
  %v196 = vpop.f32.mrb[0].mxu0
  %197 = vdwg.mxu0
  %vm198 = vcmask 31744
  %199 = vst.msk [vmem:[%s5] sm:$0xff] %vm198, %v195
  // Predicated region
  $region22: #{actor_forward.1} parent=0 // pred_check
    _
  $region23: #{actor_forward.1} parent=0 // pred_check_branch
    %201 = sbr.rel (0) target = $region25
  $region24: #{actor_forward.1} parent=0 // pred_region
    _
  $region25: #{actor_forward.1} parent=0 // pred_fallthru
    _
  // Predicated region
  $region26: #{actor_forward.1} parent=0 // pred_check
    _
  $region27: #{actor_forward.1} parent=0 // pred_check_branch
    %203 = sbr.rel (0) target = $region29
  $region28: #{actor_forward.1} parent=0 // pred_region
    _
  $region29: #{actor_forward.1} parent=0 // pred_fallthru
    _

</llo_original>
